<compile_context>
chip_gen: v5e
topology: v5e:2x2
jax: 0.10.0
libtpu: 0.0.40
codegen_flags: <defaults>
</compile_context>

<pallas_src>
import jax
import jax.numpy as jnp
from jax.experimental import pallas as pl
from jax.experimental.pallas import tpu as pltpu
import numpy as np

# ---------------------------------------------------------------------------
# Problem sizes (d_model must equal rm_d_model for the reference module's
# mlp_gamma second Linear(rm_d_model, rm_d_model) to type-check).
# ---------------------------------------------------------------------------
B = 2
S = 8
D_MODEL = 128
RM_NUM_SLOTS = 4
RM_D_MODEL = 128          # == D_MODEL (required by the PyTorch module)
MEM_DIM = RM_NUM_SLOTS * RM_D_MODEL
EPS = 1e-6


def _csc_kernel(x_ref, mem_ref,
                w1gb_ref,            # (MEM_DIM, 2*D) bf16   fused mlp_gamma[0] || mlp_beta[0]
                w2g_ref, w2b_ref,    # (D, D) bf16 each
                wp_ref,              # (D, D) bf16           pilayer weight
                bias_ref,            # (8, D) f32 packed: b1g,b1b,b2g+gamma,b2b+beta,bp,0,0,0
                o_ref):
    x = x_ref[...].astype(jnp.float32)          # (TN, D)
    mem = mem_ref[...]                          # (TN, MEM_DIM) f32

    biases = bias_ref[...]                      # (8, D) f32 — single dense vreg tile
    b1g = biases[0:1, :]
    b1b = biases[1:2, :]
    b2g_p = biases[2:3, :]                      # b2g + gamma   (folded)
    b2b_p = biases[3:4, :]                      # b2b + beta    (folded)
    bp = biases[4:5, :]

    # ---- fused first Linears of mlp_gamma / mlp_beta: ONE (TN,M)x(M,2D) pass
    h = jnp.dot(mem.astype(jnp.bfloat16), w1gb_ref[...],
                preferred_element_type=jnp.float32)          # (TN, 2D) f32 acc
    hg = jnp.maximum(h[:, :D_MODEL] + b1g, 0.0)              # ReLU
    hb = jnp.maximum(h[:, D_MODEL:] + b1b, 0.0)

    # ---- second Linears; gamma/beta already folded into the biases ---------
    gamma_hat = jnp.dot(hg.astype(jnp.bfloat16), w2g_ref[...],
                        preferred_element_type=jnp.float32) + b2g_p
    beta_hat = jnp.dot(hb.astype(jnp.bfloat16), w2b_ref[...],
                       preferred_element_type=jnp.float32) + b2b_p

    # ---- conditional layernorm in f32 (torch unbiased std, eps added to std)
    mean = jnp.mean(x, axis=-1, keepdims=True)
    xc = x - mean
    var_unbiased = jnp.sum(xc * xc, axis=-1, keepdims=True) * (1.0 / (D_MODEL - 1))
    std = jnp.sqrt(var_unbiased)
    inv = 1.0 / (std + EPS)                     # per-row reciprocal on (TN, 1)
    y = gamma_hat * (xc * inv) + beta_hat

    # ---- pilayer (fused Linear sublayer) + residual -------------------------
    # TODO(synk): dropout is a no-op here (inference mode); pilayer is an
    # arbitrary callable in the reference — modeled as Linear(d_model, d_model).
    pi = jnp.dot(y.astype(jnp.bfloat16), wp_ref[...],
                 preferred_element_type=jnp.float32) + bp
    o_ref[...] = (x + pi).astype(o_ref.dtype)


def conditional_sublayer_connection(x, memory, params):
    """x: (B, S, D_MODEL), memory: (B, S, MEM_DIM) -> (B, S, D_MODEL)."""
    Bx, Sx, D = x.shape
    N = Bx * Sx
    M = memory.shape[-1]
    x2 = x.reshape(N, D)
    mem2 = memory.reshape(N, M)

    # TN multiple of 8 (f32 sublane tile). grid > 1 so both v7x TensorCores
    # engage via the "parallel" dimension semantic; weight blocks use constant
    # index maps so they stay VMEM-resident across grid iterations.
    TN = 8
    assert N % TN == 0
    grid = (N // TN,)

    # --- parameter packing / folding (cheap one-time XLA ops) ----------------
    w1gb = jnp.concatenate([params["w1g"], params["w1b"]], axis=1).astype(jnp.bfloat16)
    w2g = params["w2g"].astype(jnp.bfloat16)
    w2b = params["w2b"].astype(jnp.bfloat16)
    wp = params["wp"].astype(jnp.bfloat16)
    bias_pack = jnp.zeros((8, D), jnp.float32)
    bias_pack = bias_pack.at[0].set(params["b1g"][0])
    bias_pack = bias_pack.at[1].set(params["b1b"][0])
    bias_pack = bias_pack.at[2].set(params["b2g"][0] + params["gamma"][0])
    bias_pack = bias_pack.at[3].set(params["b2b"][0] + params["beta"][0])
    bias_pack = bias_pack.at[4].set(params["bp"][0])

    tok_x = pl.BlockSpec((TN, D), lambda i: (i, 0))
    tok_m = pl.BlockSpec((TN, M), lambda i: (i, 0))

    def full(shape):
        return pl.BlockSpec(shape, lambda i: (0, 0))

    out = pl.pallas_call(
        _csc_kernel,
        out_shape=jax.ShapeDtypeStruct((N, D), x.dtype),
        grid_spec=pltpu.PrefetchScalarGridSpec(
            num_scalar_prefetch=0,
            grid=grid,
            in_specs=[
                tok_x,                 # x
                tok_m,                 # memory
                full((M, 2 * D)),      # fused first-linear weights (bf16)
                full((D, D)),          # w2g (bf16)
                full((D, D)),          # w2b (bf16)
                full((D, D)),          # wp  (bf16)
                full((8, D)),          # packed biases (f32)
            ],
            out_specs=tok_x,
        ),
        compiler_params=pltpu.CompilerParams(
            dimension_semantics=("parallel",),
            vmem_limit_bytes=32 * 1024 * 1024),
    )(x2, mem2, w1gb, w2g, w2b, wp, bias_pack)
    return out.reshape(Bx, Sx, D)


# ---------------------------------------------------------------------------
# Deterministic parameter initialization (matches module shapes; xavier-uniform
# weights, 0.1 biases, gamma=1, beta=0). Weights stored as (in, out), f32.
# ---------------------------------------------------------------------------
def init_params(key):
    def xavier(key, fan_in, fan_out):
        bound = float(np.sqrt(6.0 / (fan_in + fan_out)))
        return jax.random.uniform(key, (fan_in, fan_out), jnp.float32, -bound, bound)

    ks = jax.random.split(key, 5)
    return {
        "w1g": xavier(ks[0], MEM_DIM, D_MODEL),
        "b1g": jnp.full((1, D_MODEL), 0.1, jnp.float32),
        "w2g": xavier(ks[1], RM_D_MODEL, RM_D_MODEL),
        "b2g": jnp.full((1, RM_D_MODEL), 0.1, jnp.float32),
        "w1b": xavier(ks[2], MEM_DIM, D_MODEL),
        "b1b": jnp.full((1, D_MODEL), 0.1, jnp.float32),
        "w2b": xavier(ks[3], D_MODEL, D_MODEL),
        "b2b": jnp.full((1, D_MODEL), 0.1, jnp.float32),
        "gamma": jnp.ones((1, D_MODEL), jnp.float32),
        "beta": jnp.zeros((1, D_MODEL), jnp.float32),
        "wp": xavier(ks[4], D_MODEL, D_MODEL),
        "bp": jnp.full((1, D_MODEL), 0.1, jnp.float32),
    }


def reference_f32(x, memory, p):
    """Pure-JAX f32 reference mirroring the PyTorch forward exactly."""
    hg = jnp.maximum(memory @ p["w1g"] + p["b1g"], 0.0)
    dg = hg @ p["w2g"] + p["b2g"]
    hb = jnp.maximum(memory @ p["w1b"] + p["b1b"], 0.0)
    db = hb @ p["w2b"] + p["b2b"]
    gamma_hat = p["gamma"][0] + dg
    beta_hat = p["beta"][0] + db
    mean = jnp.mean(x, axis=-1, keepdims=True)
    xc = x - mean
    std = jnp.sqrt(jnp.sum(xc * xc, axis=-1, keepdims=True) / (D_MODEL - 1))
    y = gamma_hat * xc / (std + EPS) + beta_hat
    return x + y @ p["wp"] + p["bp"]


def reference_bf16(x, memory, p):
    """Reference with bf16 matmul operands + f32 accumulation (mirrors the
    kernel's intended precision trade) for a tight correctness check."""
    bf = lambda a: a.astype(jnp.bfloat16)
    dot = lambda a, b: jnp.dot(bf(a), bf(b), preferred_element_type=jnp.float32)
    hg = jnp.maximum(dot(memory, p["w1g"]) + p["b1g"], 0.0)
    dg = dot(hg, p["w2g"]) + p["b2g"]
    hb = jnp.maximum(dot(memory, p["w1b"]) + p["b1b"], 0.0)
    db = dot(hb, p["w2b"]) + p["b2b"]
    gamma_hat = p["gamma"][0] + dg
    beta_hat = p["beta"][0] + db
    mean = jnp.mean(x, axis=-1, keepdims=True)
    xc = x - mean
    std = jnp.sqrt(jnp.sum(xc * xc, axis=-1, keepdims=True) / (D_MODEL - 1))
    y = gamma_hat * (xc * (1.0 / (std + EPS))) + beta_hat
    return x + dot(y, p["wp"]) + p["bp"]


if __name__ == "__main__":
    key = jax.random.PRNGKey(0)
    kx, km, kp = jax.random.split(key, 3)
    x = jax.random.normal(kx, (B, S, D_MODEL), jnp.float32)
    memory = jax.random.normal(km, (B, S, MEM_DIM), jnp.float32)
    params = init_params(kp)

    out = conditional_sublayer_connection(x, memory, params)
    out = jax.block_until_ready(out)

    # Tight check against a bf16-matmul-aware reference (same arithmetic).
    ref_q = reference_bf16(x, memory, params)
    np.testing.assert_allclose(np.asarray(out), np.asarray(ref_q),
                               rtol=1e-3, atol=1e-3)

    # Loose check against the pure-f32 module semantics: the gap is the
    # intentional bf16 weight/activation precision trade noted in the review.
    ref = reference_f32(x, memory, params)
    np.testing.assert_allclose(np.asarray(out), np.asarray(ref),
                               rtol=5e-2, atol=5e-2)

    print("KERNEL_OK")
</pallas_src>

<mosaic_0001>
module attributes {stable_mosaic.version = 11 : i64} {
  func.func @_csc_kernel(%arg0: i32, %arg1: memref<8x128xf32, #tpu.memory_space<vmem>>, %arg2: memref<8x512xf32, #tpu.memory_space<vmem>>, %arg3: memref<512x256xbf16, #tpu.memory_space<vmem>>, %arg4: memref<128x128xbf16, #tpu.memory_space<vmem>>, %arg5: memref<128x128xbf16, #tpu.memory_space<vmem>>, %arg6: memref<128x128xbf16, #tpu.memory_space<vmem>>, %arg7: memref<8x128xf32, #tpu.memory_space<vmem>>, %arg8: memref<8x128xf32, #tpu.memory_space<vmem>>) attributes {dimension_semantics = [#tpu.dimension_semantics<parallel>], iteration_bounds = array<i64: 2>, scalar_prefetch = 0 : i64, scratch_operands = 0 : i64, tpu.core_type = #tpu.core_type<tc>, window_params = [{transform_indices = @transform_0, window_bounds = array<i64: 8, 128>}, {transform_indices = @transform_1, window_bounds = array<i64: 8, 512>}, {pipeline_mode = #tpu.pipeline_mode<synchronous>, transform_indices = @transform_2, window_bounds = array<i64: 512, 256>}, {pipeline_mode = #tpu.pipeline_mode<synchronous>, transform_indices = @transform_3, window_bounds = array<i64: 128, 128>}, {pipeline_mode = #tpu.pipeline_mode<synchronous>, transform_indices = @transform_4, window_bounds = array<i64: 128, 128>}, {pipeline_mode = #tpu.pipeline_mode<synchronous>, transform_indices = @transform_5, window_bounds = array<i64: 128, 128>}, {pipeline_mode = #tpu.pipeline_mode<synchronous>, transform_indices = @transform_6, window_bounds = array<i64: 8, 128>}, {transform_indices = @transform_7, window_bounds = array<i64: 8, 128>}]} {
    %c0 = arith.constant 0 : index
    %c0_0 = arith.constant 0 : index
    %0 = vector.load %arg1[%c0, %c0_0] : memref<8x128xf32, #tpu.memory_space<vmem>>, vector<8x128xf32>
    %c0_1 = arith.constant 0 : index
    %c0_2 = arith.constant 0 : index
    %1 = vector.load %arg2[%c0_1, %c0_2] : memref<8x512xf32, #tpu.memory_space<vmem>>, vector<8x512xf32>
    %c0_3 = arith.constant 0 : index
    %c0_4 = arith.constant 0 : index
    %2 = vector.load %arg7[%c0_3, %c0_4] : memref<8x128xf32, #tpu.memory_space<vmem>>, vector<8x128xf32>
    %3 = vector.extract_strided_slice %2 {offsets = [0, 0], sizes = [1, 128], strides = [1, 1]} : vector<8x128xf32> to vector<1x128xf32>
    %4 = vector.extract_strided_slice %2 {offsets = [1, 0], sizes = [1, 128], strides = [1, 1]} : vector<8x128xf32> to vector<1x128xf32>
    %5 = vector.extract_strided_slice %2 {offsets = [2, 0], sizes = [1, 128], strides = [1, 1]} : vector<8x128xf32> to vector<1x128xf32>
    %6 = vector.extract_strided_slice %2 {offsets = [3, 0], sizes = [1, 128], strides = [1, 1]} : vector<8x128xf32> to vector<1x128xf32>
    %7 = vector.extract_strided_slice %2 {offsets = [4, 0], sizes = [1, 128], strides = [1, 1]} : vector<8x128xf32> to vector<1x128xf32>
    %8 = arith.truncf %1 : vector<8x512xf32> to vector<8x512xbf16>
    %c0_5 = arith.constant 0 : index
    %c0_6 = arith.constant 0 : index
    %9 = vector.load %arg3[%c0_5, %c0_6] : memref<512x256xbf16, #tpu.memory_space<vmem>>, vector<512x256xbf16>
    %cst = arith.constant dense<0.000000e+00> : vector<8x256xf32>
    %10 = tpu.matmul %8, %9, %cst {dimension_numbers = #tpu.dot_dimension_numbers<[1], [0], [0], [1], [0, 0, 1, 1], [], []>} : vector<8x512xbf16>, vector<512x256xbf16>, vector<8x256xf32> -> vector<8x256xf32>
    %11 = vector.extract_strided_slice %10 {offsets = [0, 0], sizes = [8, 128], strides = [1, 1]} : vector<8x256xf32> to vector<8x128xf32>
    %12 = vector.broadcast %3 : vector<1x128xf32> to vector<8x128xf32>
    %13 = arith.addf %11, %12 : vector<8x128xf32>
    %cst_7 = arith.constant 0.000000e+00 : f32
    %14 = vector.broadcast %cst_7 : f32 to vector<8x128xf32>
    %15 = arith.maximumf %13, %14 : vector<8x128xf32>
    %16 = vector.extract_strided_slice %10 {offsets = [0, 128], sizes = [8, 128], strides = [1, 1]} : vector<8x256xf32> to vector<8x128xf32>
    %17 = vector.broadcast %4 : vector<1x128xf32> to vector<8x128xf32>
    %18 = arith.addf %16, %17 : vector<8x128xf32>
    %cst_8 = arith.constant 0.000000e+00 : f32
    %19 = vector.broadcast %cst_8 : f32 to vector<8x128xf32>
    %20 = arith.maximumf %18, %19 : vector<8x128xf32>
    %21 = arith.truncf %15 : vector<8x128xf32> to vector<8x128xbf16>
    %c0_9 = arith.constant 0 : index
    %c0_10 = arith.constant 0 : index
    %22 = vector.load %arg4[%c0_9, %c0_10] : memref<128x128xbf16, #tpu.memory_space<vmem>>, vector<128x128xbf16>
    %cst_11 = arith.constant dense<0.000000e+00> : vector<8x128xf32>
    %23 = tpu.matmul %21, %22, %cst_11 {dimension_numbers = #tpu.dot_dimension_numbers<[1], [0], [0], [1], [0, 0, 1, 1], [], []>} : vector<8x128xbf16>, vector<128x128xbf16>, vector<8x128xf32> -> vector<8x128xf32>
    %24 = vector.broadcast %5 : vector<1x128xf32> to vector<8x128xf32>
    %25 = arith.addf %23, %24 : vector<8x128xf32>
    %26 = arith.truncf %20 : vector<8x128xf32> to vector<8x128xbf16>
    %c0_12 = arith.constant 0 : index
    %c0_13 = arith.constant 0 : index
    %27 = vector.load %arg5[%c0_12, %c0_13] : memref<128x128xbf16, #tpu.memory_space<vmem>>, vector<128x128xbf16>
    %cst_14 = arith.constant dense<0.000000e+00> : vector<8x128xf32>
    %28 = tpu.matmul %26, %27, %cst_14 {dimension_numbers = #tpu.dot_dimension_numbers<[1], [0], [0], [1], [0, 0, 1, 1], [], []>} : vector<8x128xbf16>, vector<128x128xbf16>, vector<8x128xf32> -> vector<8x128xf32>
    %29 = vector.broadcast %6 : vector<1x128xf32> to vector<8x128xf32>
    %30 = arith.addf %28, %29 : vector<8x128xf32>
    %cst_15 = arith.constant dense<0.000000e+00> : vector<8xf32>
    %31 = vector.multi_reduction <add>, %0, %cst_15 [1] : vector<8x128xf32> to vector<8xf32>
    %32 = vector.shape_cast %31 : vector<8xf32> to vector<8x1xf32>
    %cst_16 = arith.constant 1.280000e+02 : f32
    %33 = vector.broadcast %cst_16 : f32 to vector<8x1xf32>
    %34 = arith.divf %32, %33 : vector<8x1xf32>
    %35 = vector.broadcast %34 : vector<8x1xf32> to vector<8x128xf32>
    %36 = arith.subf %0, %35 : vector<8x128xf32>
    %37 = arith.mulf %36, %36 : vector<8x128xf32>
    %cst_17 = arith.constant dense<0.000000e+00> : vector<8xf32>
    %38 = vector.multi_reduction <add>, %37, %cst_17 [1] : vector<8x128xf32> to vector<8xf32>
    %39 = vector.shape_cast %38 : vector<8xf32> to vector<8x1xf32>
    %cst_18 = arith.constant 0.00787401571 : f32
    %40 = vector.broadcast %cst_18 : f32 to vector<8x1xf32>
    %41 = arith.mulf %39, %40 : vector<8x1xf32>
    %42 = math.sqrt %41 : vector<8x1xf32>
    %cst_19 = arith.constant 9.99999997E-7 : f32
    %43 = vector.broadcast %cst_19 : f32 to vector<8x1xf32>
    %44 = arith.addf %42, %43 : vector<8x1xf32>
    %cst_20 = arith.constant 1.000000e+00 : f32
    %45 = vector.broadcast %cst_20 : f32 to vector<8x1xf32>
    %46 = arith.divf %45, %44 : vector<8x1xf32>
    %47 = vector.broadcast %46 : vector<8x1xf32> to vector<8x128xf32>
    %48 = arith.mulf %36, %47 : vector<8x128xf32>
    %49 = arith.mulf %25, %48 : vector<8x128xf32>
    %50 = arith.addf %49, %30 : vector<8x128xf32>
    %51 = arith.truncf %50 : vector<8x128xf32> to vector<8x128xbf16>
    %c0_21 = arith.constant 0 : index
    %c0_22 = arith.constant 0 : index
    %52 = vector.load %arg6[%c0_21, %c0_22] : memref<128x128xbf16, #tpu.memory_space<vmem>>, vector<128x128xbf16>
    %cst_23 = arith.constant dense<0.000000e+00> : vector<8x128xf32>
    %53 = tpu.matmul %51, %52, %cst_23 {dimension_numbers = #tpu.dot_dimension_numbers<[1], [0], [0], [1], [0, 0, 1, 1], [], []>} : vector<8x128xbf16>, vector<128x128xbf16>, vector<8x128xf32> -> vector<8x128xf32>
    %54 = vector.broadcast %7 : vector<1x128xf32> to vector<8x128xf32>
    %55 = arith.addf %53, %54 : vector<8x128xf32>
    %56 = arith.addf %0, %55 : vector<8x128xf32>
    %c0_24 = arith.constant 0 : index
    %c0_25 = arith.constant 0 : index
    %57 = vector.load %arg8[%c0_24, %c0_25] : memref<8x128xf32, #tpu.memory_space<vmem>>, vector<8x128xf32>
    tpu.vector_store %arg8[%c0_24, %c0_25], %56 {strides = array<i32>} : memref<8x128xf32, #tpu.memory_space<vmem>>, vector<8x128xf32>,
    return
  }
  func.func @transform_0(%arg0: i32) -> (i32, i32) {
    %c0_i32 = arith.constant 0 : i32
    %c0_i32_0 = arith.constant 0 : i32
    return %arg0, %c0_i32 : i32, i32
  }
  func.func @transform_1(%arg0: i32) -> (i32, i32) {
    %c0_i32 = arith.constant 0 : i32
    %c0_i32_0 = arith.constant 0 : i32
    return %arg0, %c0_i32 : i32, i32
  }
  func.func @transform_2(%arg0: i32) -> (i32, i32) {
    %c0_i32 = arith.constant 0 : i32
    %c0_i32_0 = arith.constant 0 : i32
    %c0_i32_1 = arith.constant 0 : i32
    return %c0_i32, %c0_i32_0 : i32, i32
  }
  func.func @transform_3(%arg0: i32) -> (i32, i32) {
    %c0_i32 = arith.constant 0 : i32
    %c0_i32_0 = arith.constant 0 : i32
    %c0_i32_1 = arith.constant 0 : i32
    return %c0_i32, %c0_i32_0 : i32, i32
  }
  func.func @transform_4(%arg0: i32) -> (i32, i32) {
    %c0_i32 = arith.constant 0 : i32
    %c0_i32_0 = arith.constant 0 : i32
    %c0_i32_1 = arith.constant 0 : i32
    return %c0_i32, %c0_i32_0 : i32, i32
  }
  func.func @transform_5(%arg0: i32) -> (i32, i32) {
    %c0_i32 = arith.constant 0 : i32
    %c0_i32_0 = arith.constant 0 : i32
    %c0_i32_1 = arith.constant 0 : i32
    return %c0_i32, %c0_i32_0 : i32, i32
  }
  func.func @transform_6(%arg0: i32) -> (i32, i32) {
    %c0_i32 = arith.constant 0 : i32
    %c0_i32_0 = arith.constant 0 : i32
    %c0_i32_1 = arith.constant 0 : i32
    return %c0_i32, %c0_i32_0 : i32, i32
  }
  func.func @transform_7(%arg0: i32) -> (i32, i32) {
    %c0_i32 = arith.constant 0 : i32
    %c0_i32_0 = arith.constant 0 : i32
    return %arg0, %c0_i32 : i32, i32
  }
}

</mosaic_0001>

<llo_original>
// kernel: tpu_custom_call.1
$region0: #{tpu_custom_call.1}
  #allocation0 [shape = 'u32[]', space=smem, size = 0x4, offset = 0x4, fixed_abs, tag = 'smem constant byte address 0x4 - core index']
  #allocation1 [shape = 'u32[72,128]{1,0:T(1,128)}', space=vmem, size = 0x9000, scoped, tag = 'internal scratch']
  %s0 = inlined_call_operand.hbm [shape: f32[16,128], index: 0, kind: input, shape index: {}]
  %s1 = inlined_call_operand.hbm [shape: f32[16,512], index: 1, kind: input, shape index: {}]
  %s2 = inlined_call_operand.hbm [shape: bf16[512,256], index: 2, kind: input, shape index: {}]
  %s3 = inlined_call_operand.hbm [shape: bf16[128,128], index: 3, kind: input, shape index: {}]
  %s4 = inlined_call_operand.hbm [shape: bf16[128,128], index: 4, kind: input, shape index: {}]
  %s5 = inlined_call_operand.hbm [shape: bf16[128,128], index: 5, kind: input, shape index: {}]
  %s6 = inlined_call_operand.hbm [shape: f32[8,128], index: 6, kind: input, shape index: {}]
  %s7 = inlined_call_operand.hbm [shape: f32[16,128], index: 7, kind: output, shape index: {}]
  %s8 = sld [smem:[#allocation0]]
  $region89: #{tpu_custom_call.1} parent=0
    _
  %s10 = ssub.s32 1, %s8
  %s11 = scalar_select 0, %s10, %s8
  $region1: #{tpu_custom_call.1} parent=0
    #allocation2 [shape = 'u8[8192]{0}', space=vmem, size = 0x2000, scoped, tag = 'input window, operand 0']
    #allocation3 [shape = 's32[2]{0}', space=sflag, size = 0x8, scoped, tag = 'scoped memory for tpu_custom_call.1']
    #allocation4 [shape = 's32[2]{0}', space=sflag, size = 0x8, scoped, tag = 'scoped memory for tpu_custom_call.1']
    #allocation5 [shape = 'u8[32768]{0}', space=vmem, size = 0x8000, scoped, tag = 'input window, operand 1']
    #allocation6 [shape = 's32[2]{0}', space=sflag, size = 0x8, scoped, tag = 'scoped memory for tpu_custom_call.1']
    #allocation7 [shape = 'u8[262144]{0}', space=vmem, size = 0x40000, scoped, tag = 'input window, operand 2, single buffered']
    #allocation8 [shape = 'u8[32768]{0}', space=vmem, size = 0x8000, scoped, tag = 'input window, operand 3, single buffered']
    #allocation9 [shape = 's32[1]{0}', space=sflag, size = 0x4, scoped, tag = 'scoped memory for tpu_custom_call.1']
    #allocation10 [shape = 'u8[32768]{0}', space=vmem, size = 0x8000, scoped, tag = 'input window, operand 4, single buffered']
    #allocation11 [shape = 'u8[32768]{0}', space=vmem, size = 0x8000, scoped, tag = 'input window, operand 5, single buffered']
    #allocation12 [shape = 's32[1]{0}', space=sflag, size = 0x4, scoped, tag = 'scoped memory for tpu_custom_call.1']
    #allocation13 [shape = 'u8[4096]{0}', space=vmem, size = 0x1000, scoped, tag = 'input window, operand 6, single buffered']
    #allocation14 [shape = 'u8[8192]{0}', space=vmem, size = 0x2000, scoped, tag = 'output window, operand 0']
    %12 = vsyncpa [#allocation3], 0
    %s13 = scalar_lea.sflag [#allocation3], 1
    %14 = vsyncpa %s13, 0
    %15 = vsyncpa [#allocation6], 0
    %s16 = scalar_lea.sflag [#allocation6], 1
    %17 = vsyncpa %s16, 0
    %18 = vsyncpa [#allocation9], 0
    %19 = vsyncpa [#allocation12], 0
    %20 = vsyncpa [#allocation4], 0
    %s21 = scalar_lea.sflag [#allocation4], 1
    %22 = vsyncpa %s21, 0
    loop: start=0, step=1, limit=4
    $region2: #{tpu_custom_call.1} parent=1 // loop_pre_header
      _
    $region3: #{tpu_custom_call.1} parent=1 // loop_header
      %s24 = sphi 0, %s28
      %p25 = scmp.ge.s32.totalorder %s24, 4
      %s34 = sphi 0, %s36
      %s37 = sphi 0, %s34
      %s38 = sphi 0, %s37
      %s54 = sphi 0, %s38
      %s60 = sphi 0, %s62
      %s63 = sphi 0, %s60
      %s64 = sphi 0, %s63
      %s80 = sphi 0, %s64
      %s84 = sphi 0, %s84
      %s86 = sphi 0, %s84
      %s87 = sphi 0, %s86
      %s101 = sphi 0, %s87
      %s105 = sphi 0, %s105
      %s107 = sphi 0, %s105
      %s108 = sphi 0, %s107
      %s122 = sphi 0, %s108
      %s126 = sphi 0, %s126
      %s128 = sphi 0, %s126
      %s129 = sphi 0, %s128
      %s143 = sphi 0, %s129
      %s147 = sphi 0, %s147
      %s149 = sphi 0, %s147
      %s150 = sphi 0, %s149
      %s164 = sphi 0, %s150
      %s168 = sphi 0, %s168
      %s170 = sphi 0, %s168
      %s171 = sphi 0, %s170
      %s185 = sphi 0, %s171
      %s191 = sphi 0, %s193
      %s194 = sphi 0, %s191
      %s195 = sphi 0, %s194
      %s211 = sphi 0, %s195
    $region4: #{tpu_custom_call.1} parent=1 // loop_header_branch
      %27 = sbr.rel (%p25) target = $region8
    $region5: #{tpu_custom_call.1} parent=1 // loop_body
      %s29 = ssub.s32 %s24, 1
      %s30 = ssub.s32 %s24, 2
      %s31 = sadd.s32 %s24, 1
      %s32 = ssub.s32 %s24, %s31
      %p33 = scmp.eq.s32.totalorder %s32, 0
      %s35 = sadd.s32 %s34, 1
      %s36 = scalar_select %p33, %s34, %s35
      %p39 = pneg %p33
      %p40 = scmp.eq.s32.totalorder %s24, 1
      %p41 = por %p39, %p40
      %p42 = scmp.ne.s32.totalorder %s34, %s37
      %p43 = scmp.eq.s32.totalorder %s24, 0
      %p44 = por %p42, %p43
      %p45 = scmp.ne.s32.totalorder %s34, %s37
      %p46 = scmp.eq.s32.totalorder %s29, 1
      %p47 = por %p45, %p46
      %p48 = scmp.ne.s32.totalorder %s37, %s38
      %p49 = scmp.eq.s32.totalorder %s29, 0
      %p50 = por %p48, %p49
      %p51 = scmp.ne.s32.totalorder %s37, %s38
      %p52 = scmp.eq.s32.totalorder %s30, 1
      %p53 = por %p51, %p52
      %p55 = scmp.ne.s32.totalorder %s38, %s54
      %p56 = scmp.eq.s32.totalorder %s30, 0
      %p57 = por %p55, %p56
      %s58 = ssub.s32 %s24, %s31
      %p59 = scmp.eq.s32.totalorder %s58, 0
      %s61 = sadd.s32 %s60, 1
      %s62 = scalar_select %p59, %s60, %s61
      %p65 = pneg %p59
      %p66 = scmp.eq.s32.totalorder %s24, 1
      %p67 = por %p65, %p66
      %p68 = scmp.ne.s32.totalorder %s60, %s63
      %p69 = scmp.eq.s32.totalorder %s24, 0
      %p70 = por %p68, %p69
      %p71 = scmp.ne.s32.totalorder %s60, %s63
      %p72 = scmp.eq.s32.totalorder %s29, 1
      %p73 = por %p71, %p72
      %p74 = scmp.ne.s32.totalorder %s63, %s64
      %p75 = scmp.eq.s32.totalorder %s29, 0
      %p76 = por %p74, %p75
      %p77 = scmp.ne.s32.totalorder %s63, %s64
      %p78 = scmp.eq.s32.totalorder %s30, 1
      %p79 = por %p77, %p78
      %p81 = scmp.ne.s32.totalorder %s64, %s80
      %p82 = scmp.eq.s32.totalorder %s30, 0
      %p83 = por %p81, %p82
      %s85 = sadd.s32 %s84, 1
      %p88 = scmp.eq.s32.totalorder %s24, 1
      %p89 = scmp.ne.s32.totalorder %s84, %s86
      %p90 = scmp.eq.s32.totalorder %s24, 0
      %p91 = por %p89, %p90
      %p92 = scmp.ne.s32.totalorder %s84, %s86
      %p93 = scmp.eq.s32.totalorder %s29, 1
      %p94 = por %p92, %p93
      %p95 = scmp.ne.s32.totalorder %s86, %s87
      %p96 = scmp.eq.s32.totalorder %s29, 0
      %p97 = por %p95, %p96
      %p98 = scmp.ne.s32.totalorder %s86, %s87
      %p99 = scmp.eq.s32.totalorder %s30, 1
      %p100 = por %p98, %p99
      %p102 = scmp.ne.s32.totalorder %s87, %s101
      %p103 = scmp.eq.s32.totalorder %s30, 0
      %p104 = por %p102, %p103
      %s106 = sadd.s32 %s105, 1
      %p109 = scmp.eq.s32.totalorder %s24, 1
      %p110 = scmp.ne.s32.totalorder %s105, %s107
      %p111 = scmp.eq.s32.totalorder %s24, 0
      %p112 = por %p110, %p111
      %p113 = scmp.ne.s32.totalorder %s105, %s107
      %p114 = scmp.eq.s32.totalorder %s29, 1
      %p115 = por %p113, %p114
      %p116 = scmp.ne.s32.totalorder %s107, %s108
      %p117 = scmp.eq.s32.totalorder %s29, 0
      %p118 = por %p116, %p117
      %p119 = scmp.ne.s32.totalorder %s107, %s108
      %p120 = scmp.eq.s32.totalorder %s30, 1
      %p121 = por %p119, %p120
      %p123 = scmp.ne.s32.totalorder %s108, %s122
      %p124 = scmp.eq.s32.totalorder %s30, 0
      %p125 = por %p123, %p124
      %s127 = sadd.s32 %s126, 1
      %p130 = scmp.eq.s32.totalorder %s24, 1
      %p131 = scmp.ne.s32.totalorder %s126, %s128
      %p132 = scmp.eq.s32.totalorder %s24, 0
      %p133 = por %p131, %p132
      %p134 = scmp.ne.s32.totalorder %s126, %s128
      %p135 = scmp.eq.s32.totalorder %s29, 1
      %p136 = por %p134, %p135
      %p137 = scmp.ne.s32.totalorder %s128, %s129
      %p138 = scmp.eq.s32.totalorder %s29, 0
      %p139 = por %p137, %p138
      %p140 = scmp.ne.s32.totalorder %s128, %s129
      %p141 = scmp.eq.s32.totalorder %s30, 1
      %p142 = por %p140, %p141
      %p144 = scmp.ne.s32.totalorder %s129, %s143
      %p145 = scmp.eq.s32.totalorder %s30, 0
      %p146 = por %p144, %p145
      %s148 = sadd.s32 %s147, 1
      %p151 = scmp.eq.s32.totalorder %s24, 1
      %p152 = scmp.ne.s32.totalorder %s147, %s149
      %p153 = scmp.eq.s32.totalorder %s24, 0
      %p154 = por %p152, %p153
      %p155 = scmp.ne.s32.totalorder %s147, %s149
      %p156 = scmp.eq.s32.totalorder %s29, 1
      %p157 = por %p155, %p156
      %p158 = scmp.ne.s32.totalorder %s149, %s150
      %p159 = scmp.eq.s32.totalorder %s29, 0
      %p160 = por %p158, %p159
      %p161 = scmp.ne.s32.totalorder %s149, %s150
      %p162 = scmp.eq.s32.totalorder %s30, 1
      %p163 = por %p161, %p162
      %p165 = scmp.ne.s32.totalorder %s150, %s164
      %p166 = scmp.eq.s32.totalorder %s30, 0
      %p167 = por %p165, %p166
      %s169 = sadd.s32 %s168, 1
      %p172 = scmp.eq.s32.totalorder %s24, 1
      %p173 = scmp.ne.s32.totalorder %s168, %s170
      %p174 = scmp.eq.s32.totalorder %s24, 0
      %p175 = por %p173, %p174
      %p176 = scmp.ne.s32.totalorder %s168, %s170
      %p177 = scmp.eq.s32.totalorder %s29, 1
      %p178 = por %p176, %p177
      %p179 = scmp.ne.s32.totalorder %s170, %s171
      %p180 = scmp.eq.s32.totalorder %s29, 0
      %p181 = por %p179, %p180
      %p182 = scmp.ne.s32.totalorder %s170, %s171
      %p183 = scmp.eq.s32.totalorder %s30, 1
      %p184 = por %p182, %p183
      %p186 = scmp.ne.s32.totalorder %s171, %s185
      %p187 = scmp.eq.s32.totalorder %s30, 0
      %p188 = por %p186, %p187
      %s189 = ssub.s32 %s24, %s31
      %p190 = scmp.eq.s32.totalorder %s189, 0
      %s192 = sadd.s32 %s191, 1
      %s193 = scalar_select %p190, %s191, %s192
      %p196 = pneg %p190
      %p197 = scmp.eq.s32.totalorder %s24, 1
      %p198 = por %p196, %p197
      %p199 = scmp.ne.s32.totalorder %s191, %s194
      %p200 = scmp.eq.s32.totalorder %s24, 0
      %p201 = por %p199, %p200
      %p202 = scmp.ne.s32.totalorder %s191, %s194
      %p203 = scmp.eq.s32.totalorder %s29, 1
      %p204 = por %p202, %p203
      %p205 = scmp.ne.s32.totalorder %s194, %s195
      %p206 = scmp.eq.s32.totalorder %s29, 0
      %p207 = por %p205, %p206
      %p208 = scmp.ne.s32.totalorder %s194, %s195
      %p209 = scmp.eq.s32.totalorder %s30, 1
      %p210 = por %p208, %p209
      %p212 = scmp.ne.s32.totalorder %s195, %s211
      %p213 = scmp.eq.s32.totalorder %s30, 0
      %p214 = por %p212, %p213
      %p215 = scmp.le.s32.totalorder 1, %s24
      %p216 = scmp.lt.s32.totalorder %s24, 3
      %p217 = pnand %p215, %p216
      %p218 = pneg %p217
      // Predicated region
      $region9: #{tpu_custom_call.1} parent=5 // pred_check
        _
      $region10: #{tpu_custom_call.1} parent=5 // pred_check_branch
        %220 = sbr.rel (%p217) target = $region12
      $region11: #{tpu_custom_call.1} parent=5 // pred_region
        %s221 = ssub.s32 %s24, 1
        // Predicated region
        $region13: #{tpu_custom_call.1} parent=11 // pred_check
          %p222 = pneg %p97
        $region14: #{tpu_custom_call.1} parent=11 // pred_check_branch
          %224 = sbr.rel (%p222) target = $region16
        $region15: #{tpu_custom_call.1} parent=11 // pred_region
          %226 = vsyncadd [#allocation6], 0
          %s227 = sshll.u32 %s2, 4
          %s228 = int_to_ptr.hbm [resolvable:$true] %s227
          %s229 = sshll.u32 [#allocation7], 4
          %s230 = int_to_ptr.vmem [resolvable:$true] %s229
          %235 = dma.hbm_to_vmem [thread:$0]  %s228, 8192, %s230, [#allocation6], 128, 128, 8
        $region16: #{tpu_custom_call.1} parent=11 // pred_fallthru
          _
        // Predicated region
        $region17: #{tpu_custom_call.1} parent=11 // pred_check
          %p236 = pneg %p118
        $region18: #{tpu_custom_call.1} parent=11 // pred_check_branch
          %238 = sbr.rel (%p236) target = $region20
        $region19: #{tpu_custom_call.1} parent=11 // pred_region
          %240 = vsyncadd [#allocation9], 0
          %s241 = sshll.u32 %s3, 4
          %s242 = int_to_ptr.hbm [resolvable:$true] %s241
          %s243 = sshll.u32 [#allocation8], 4
          %s244 = int_to_ptr.vmem [resolvable:$true] %s243
          %249 = dma.hbm_to_vmem [thread:$0]  %s242, 1024, %s244, [#allocation9], 64, 64, 4
        $region20: #{tpu_custom_call.1} parent=11 // pred_fallthru
          _
        // Predicated region
        $region21: #{tpu_custom_call.1} parent=11 // pred_check
          %p250 = pneg %p139
        $region22: #{tpu_custom_call.1} parent=11 // pred_check_branch
          %252 = sbr.rel (%p250) target = $region24
        $region23: #{tpu_custom_call.1} parent=11 // pred_region
          %254 = vsyncadd [#allocation9], 0
          %s255 = sshll.u32 %s4, 4
          %s256 = int_to_ptr.hbm [resolvable:$true] %s255
          %s257 = sshll.u32 [#allocation10], 4
          %s258 = int_to_ptr.vmem [resolvable:$true] %s257
          %263 = dma.hbm_to_vmem [thread:$0]  %s256, 1024, %s258, [#allocation9], 64, 64, 4
        $region24: #{tpu_custom_call.1} parent=11 // pred_fallthru
          _
        // Predicated region
        $region25: #{tpu_custom_call.1} parent=11 // pred_check
          %p264 = pneg %p160
        $region26: #{tpu_custom_call.1} parent=11 // pred_check_branch
          %266 = sbr.rel (%p264) target = $region28
        $region27: #{tpu_custom_call.1} parent=11 // pred_region
          %268 = vsyncadd [#allocation12], 0
          %s269 = sshll.u32 %s5, 4
          %s270 = int_to_ptr.hbm [resolvable:$true] %s269
          %s271 = sshll.u32 [#allocation11], 4
          %s272 = int_to_ptr.vmem [resolvable:$true] %s271
          %277 = dma.hbm_to_vmem [thread:$0]  %s270, 1024, %s272, [#allocation12], 64, 64, 4
        $region28: #{tpu_custom_call.1} parent=11 // pred_fallthru
          _
        // Predicated region
        $region29: #{tpu_custom_call.1} parent=11 // pred_check
          %p278 = pneg %p181
        $region30: #{tpu_custom_call.1} parent=11 // pred_check_branch
          %280 = sbr.rel (%p278) target = $region32
        $region31: #{tpu_custom_call.1} parent=11 // pred_region
          %282 = vsyncadd [#allocation12], 0
          %s284 = sshll.u32 %s6, 4
          %s285 = int_to_ptr.hbm [resolvable:$true] %s284
          %s286 = sshll.u32 [#allocation13], 4
          %s287 = int_to_ptr.vmem [resolvable:$true] %s286
          %289 = dma.hbm_to_vmem [thread:$0]  %s285, 128, %s287, [#allocation12]
        $region32: #{tpu_custom_call.1} parent=11 // pred_fallthru
          _
      $region12: #{tpu_custom_call.1} parent=5 // pred_fallthru
        _
      %p290 = scmp.lt.s32.totalorder %s24, 2
      // Predicated region
      $region33: #{tpu_custom_call.1} parent=5 // pred_check
        %p291 = pneg %p290
      $region34: #{tpu_custom_call.1} parent=5 // pred_check_branch
        %293 = sbr.rel (%p291) target = $region36
      $region35: #{tpu_custom_call.1} parent=5 // pred_region
        // Predicated region
        $region37: #{tpu_custom_call.1} parent=35 // pred_check
          %p294 = pneg %p44
        $region38: #{tpu_custom_call.1} parent=35 // pred_check_branch
          %296 = sbr.rel (%p294) target = $region40
        $region39: #{tpu_custom_call.1} parent=35 // pred_region
          %s297 = sand.u32 %s34, 1
          %s298 = scalar_lea.sflag [#allocation3], %s297
          %s299 = sand.u32 %s34, 1
          %s300 = smul.addr %s299, 8
          %s301 = scalar_lea.vmem [#allocation2], %s300
          %303 = vsyncadd %s298, 0
          %s304 = smul.addr %s24, 8
          %s305 = scalar_lea.hbm %s0, %s304
          %s307 = sshll.u32 %s305, 4
          %s308 = int_to_ptr.hbm [resolvable:$true] %s307
          %s309 = sshll.u32 %s301, 4
          %s310 = int_to_ptr.vmem [resolvable:$true] %s309
          %312 = dma.hbm_to_vmem [thread:$0]  %s308, 128, %s310, %s298
        $region40: #{tpu_custom_call.1} parent=35 // pred_fallthru
          _
        // Predicated region
        $region41: #{tpu_custom_call.1} parent=35 // pred_check
          %p313 = pneg %p70
        $region42: #{tpu_custom_call.1} parent=35 // pred_check_branch
          %315 = sbr.rel (%p313) target = $region44
        $region43: #{tpu_custom_call.1} parent=35 // pred_region
          %s316 = sand.u32 %s24, 1
          %s317 = scalar_lea.sflag [#allocation6], %s316
          %s318 = sand.u32 %s60, 1
          %s319 = smul.addr %s318, 32
          %s320 = scalar_lea.vmem [#allocation5], %s319
          %322 = vsyncadd %s317, 0
          %s323 = smul.addr %s24, 4
          %s324 = smul.addr %s323, 8
          %s325 = scalar_lea.hbm %s1, %s324
          %s327 = sshll.u32 %s325, 4
          %s328 = int_to_ptr.hbm [resolvable:$true] %s327
          %s329 = sshll.u32 %s320, 4
          %s330 = int_to_ptr.vmem [resolvable:$true] %s329
          %332 = dma.hbm_to_vmem [thread:$0]  %s328, 512, %s330, %s317
        $region44: #{tpu_custom_call.1} parent=35 // pred_fallthru
          _
      $region36: #{tpu_custom_call.1} parent=5 // pred_fallthru
        _
      %p333 = scmp.le.s32.totalorder 1, %s24
      %p334 = scmp.lt.s32.totalorder %s24, 3
      %p335 = pnand %p333, %p334
      %p336 = pneg %p335
      // Predicated region
      $region45: #{tpu_custom_call.1} parent=5 // pred_check
        _
      $region46: #{tpu_custom_call.1} parent=5 // pred_check_branch
        %338 = sbr.rel (%p335) target = $region48
      $region47: #{tpu_custom_call.1} parent=5 // pred_region
        %s339 = ssub.s32 %s24, 1
        %s340 = sand.u32 %s37, 1
        %s341 = scalar_lea.sflag [#allocation3], %s340
        %s342 = sand.u32 %s37, 1
        %s343 = smul.addr %s342, 8
        %s344 = scalar_lea.vmem [#allocation2], %s343
        // Predicated region
        $region49: #{tpu_custom_call.1} parent=47 // pred_check
          %p345 = pneg %p50
        $region50: #{tpu_custom_call.1} parent=47 // pred_check_branch
          %347 = sbr.rel (%p345) target = $region52
        $region51: #{tpu_custom_call.1} parent=47 // pred_region
          %349 = dma.done %s341, 128
        $region52: #{tpu_custom_call.1} parent=47 // pred_fallthru
          _
        %s350 = sand.u32 %s29, 1
        %s351 = scalar_lea.sflag [#allocation6], %s350
        %s352 = sand.u32 %s63, 1
        %s353 = smul.addr %s352, 32
        %s354 = scalar_lea.vmem [#allocation5], %s353
        // Predicated region
        $region53: #{tpu_custom_call.1} parent=47 // pred_check
          %p355 = pneg %p76
        $region54: #{tpu_custom_call.1} parent=47 // pred_check_branch
          %357 = sbr.rel (%p355) target = $region56
        $region55: #{tpu_custom_call.1} parent=47 // pred_region
          %359 = dma.done %s351, 512
        $region56: #{tpu_custom_call.1} parent=47 // pred_fallthru
          _
        // Predicated region
        $region57: #{tpu_custom_call.1} parent=47 // pred_check
          %p360 = pneg %p97
        $region58: #{tpu_custom_call.1} parent=47 // pred_check_branch
          %362 = sbr.rel (%p360) target = $region60
        $region59: #{tpu_custom_call.1} parent=47 // pred_region
          %364 = dma.done [#allocation6], 8192
        $region60: #{tpu_custom_call.1} parent=47 // pred_fallthru
          _
        // Predicated region
        $region61: #{tpu_custom_call.1} parent=47 // pred_check
          %p365 = pneg %p118
        $region62: #{tpu_custom_call.1} parent=47 // pred_check_branch
          %367 = sbr.rel (%p365) target = $region64
        $region63: #{tpu_custom_call.1} parent=47 // pred_region
          %369 = dma.done [#allocation9], 1024
        $region64: #{tpu_custom_call.1} parent=47 // pred_fallthru
          _
        // Predicated region
        $region65: #{tpu_custom_call.1} parent=47 // pred_check
          %p370 = pneg %p139
        $region66: #{tpu_custom_call.1} parent=47 // pred_check_branch
          %372 = sbr.rel (%p370) target = $region68
        $region67: #{tpu_custom_call.1} parent=47 // pred_region
          %374 = dma.done [#allocation9], 1024
        $region68: #{tpu_custom_call.1} parent=47 // pred_fallthru
          _
        // Predicated region
        $region69: #{tpu_custom_call.1} parent=47 // pred_check
          %p375 = pneg %p160
        $region70: #{tpu_custom_call.1} parent=47 // pred_check_branch
          %377 = sbr.rel (%p375) target = $region72
        $region71: #{tpu_custom_call.1} parent=47 // pred_region
          %379 = dma.done [#allocation12], 1024
        $region72: #{tpu_custom_call.1} parent=47 // pred_fallthru
          _
        // Predicated region
        $region73: #{tpu_custom_call.1} parent=47 // pred_check
          %p380 = pneg %p181
        $region74: #{tpu_custom_call.1} parent=47 // pred_check_branch
          %382 = sbr.rel (%p380) target = $region76
        $region75: #{tpu_custom_call.1} parent=47 // pred_region
          %384 = dma.done [#allocation12], 128
        $region76: #{tpu_custom_call.1} parent=47 // pred_fallthru
          _
        %s385 = sand.u32 %s37, 1
        %s386 = scalar_lea.sflag [#allocation3], %s385
        %s387 = sand.u32 %s37, 1
        %s388 = smul.addr %s387, 8
        %s389 = scalar_lea.vmem [#allocation2], %s388
        %p390 = pneg %p50
        %p391 = pneg %p47
        %s392 = sand.u32 %s29, 1
        %s393 = scalar_lea.sflag [#allocation6], %s392
        %s394 = sand.u32 %s63, 1
        %s395 = smul.addr %s394, 32
        %s396 = scalar_lea.vmem [#allocation5], %s395
        %p397 = pneg %p76
        %p398 = pneg %p73
        %p399 = pneg %p97
        %p400 = pneg %p94
        %p401 = pneg %p118
        %p402 = pneg %p115
        %p403 = pneg %p139
        %p404 = pneg %p136
        %p405 = pneg %p160
        %p406 = pneg %p157
        %p407 = pneg %p181
        %p408 = pneg %p178
        %p409 = pneg %p207
        %p410 = pneg %p204
        %s411 = sand.u32 %s194, 1
        %s412 = scalar_lea.sflag [#allocation4], %s411
        %s413 = sand.u32 %s194, 1
        %s414 = smul.addr %s413, 8
        %s415 = scalar_lea.vmem [#allocation14], %s414
        %v416 = vld [vmem:[%s344] sm:$0xff]
        %v417 = vld [vmem:[%s354] sm:$0xff]
        %v418 = vld [vmem:[%s354 + $0x8] sm:$0xff]
        %v419 = vld [vmem:[%s354 + $0x10] sm:$0xff]
        %v420 = vld [vmem:[%s354 + $0x18] sm:$0xff]
        %v421 = vld [vmem:[#allocation13] sm:$0xff]
        %v422 = vpack.c.bf16 %v417, %v417
        %v423 = vpack.c.bf16 %v418, %v418
        %v424 = vpack.c.bf16 %v419, %v419
        %v425 = vpack.c.bf16 %v420, %v420
        %v426 = vld [vmem:[#allocation7] sm:$0xff]
        %v427 = vld [vmem:[#allocation7 + $0x8] sm:$0xff]
        %v428 = vld [vmem:[#allocation7 + $0x10] sm:$0xff]
        %v429 = vld [vmem:[#allocation7 + $0x18] sm:$0xff]
        %v430 = vld [vmem:[#allocation7 + $0x20] sm:$0xff]
        %v431 = vld [vmem:[#allocation7 + $0x28] sm:$0xff]
        %v432 = vld [vmem:[#allocation7 + $0x30] sm:$0xff]
        %v433 = vld [vmem:[#allocation7 + $0x38] sm:$0xff]
        %v434 = vld [vmem:[#allocation7 + $0x40] sm:$0xff]
        %v435 = vld [vmem:[#allocation7 + $0x48] sm:$0xff]
        %v436 = vld [vmem:[#allocation7 + $0x50] sm:$0xff]
        %v437 = vld [vmem:[#allocation7 + $0x58] sm:$0xff]
        %v438 = vld [vmem:[#allocation7 + $0x60] sm:$0xff]
        %v439 = vld [vmem:[#allocation7 + $0x68] sm:$0xff]
        %v440 = vld [vmem:[#allocation7 + $0x70] sm:$0xff]
        %v441 = vld [vmem:[#allocation7 + $0x78] sm:$0xff]
        %v442 = vld [vmem:[#allocation7 + $0x80] sm:$0xff]
        %v443 = vld [vmem:[#allocation7 + $0x88] sm:$0xff]
        %v444 = vld [vmem:[#allocation7 + $0x90] sm:$0xff]
        %v445 = vld [vmem:[#allocation7 + $0x98] sm:$0xff]
        %v446 = vld [vmem:[#allocation7 + $0xa0] sm:$0xff]
        %v447 = vld [vmem:[#allocation7 + $0xa8] sm:$0xff]
        %v448 = vld [vmem:[#allocation7 + $0xb0] sm:$0xff]
        %v449 = vld [vmem:[#allocation7 + $0xb8] sm:$0xff]
        %v450 = vld [vmem:[#allocation7 + $0xc0] sm:$0xff]
        %v451 = vld [vmem:[#allocation7 + $0xc8] sm:$0xff]
        %v452 = vld [vmem:[#allocation7 + $0xd0] sm:$0xff]
        %v453 = vld [vmem:[#allocation7 + $0xd8] sm:$0xff]
        %v454 = vld [vmem:[#allocation7 + $0xe0] sm:$0xff]
        %v455 = vld [vmem:[#allocation7 + $0xe8] sm:$0xff]
        %v456 = vld [vmem:[#allocation7 + $0xf0] sm:$0xff]
        %v457 = vld [vmem:[#allocation7 + $0xf8] sm:$0xff]
        %v458 = vld [vmem:[#allocation7 + $0x100] sm:$0xff]
        %v459 = vld [vmem:[#allocation7 + $0x108] sm:$0xff]
        %v460 = vld [vmem:[#allocation7 + $0x110] sm:$0xff]
        %v461 = vld [vmem:[#allocation7 + $0x118] sm:$0xff]
        %v462 = vld [vmem:[#allocation7 + $0x120] sm:$0xff]
        %v463 = vld [vmem:[#allocation7 + $0x128] sm:$0xff]
        %v464 = vld [vmem:[#allocation7 + $0x130] sm:$0xff]
        %v465 = vld [vmem:[#allocation7 + $0x138] sm:$0xff]
        %v466 = vld [vmem:[#allocation7 + $0x140] sm:$0xff]
        %v467 = vld [vmem:[#allocation7 + $0x148] sm:$0xff]
        %v468 = vld [vmem:[#allocation7 + $0x150] sm:$0xff]
        %v469 = vld [vmem:[#allocation7 + $0x158] sm:$0xff]
        %v470 = vld [vmem:[#allocation7 + $0x160] sm:$0xff]
        %v471 = vld [vmem:[#allocation7 + $0x168] sm:$0xff]
        %v472 = vld [vmem:[#allocation7 + $0x170] sm:$0xff]
        %v473 = vld [vmem:[#allocation7 + $0x178] sm:$0xff]
        %v474 = vld [vmem:[#allocation7 + $0x180] sm:$0xff]
        %v475 = vld [vmem:[#allocation7 + $0x188] sm:$0xff]
        %v476 = vld [vmem:[#allocation7 + $0x190] sm:$0xff]
        %v477 = vld [vmem:[#allocation7 + $0x198] sm:$0xff]
        %v478 = vld [vmem:[#allocation7 + $0x1a0] sm:$0xff]
        %v479 = vld [vmem:[#allocation7 + $0x1a8] sm:$0xff]
        %v480 = vld [vmem:[#allocation7 + $0x1b0] sm:$0xff]
        %v481 = vld [vmem:[#allocation7 + $0x1b8] sm:$0xff]
        %v482 = vld [vmem:[#allocation7 + $0x1c0] sm:$0xff]
        %v483 = vld [vmem:[#allocation7 + $0x1c8] sm:$0xff]
        %v484 = vld [vmem:[#allocation7 + $0x1d0] sm:$0xff]
        %v485 = vld [vmem:[#allocation7 + $0x1d8] sm:$0xff]
        %v486 = vld [vmem:[#allocation7 + $0x1e0] sm:$0xff]
        %v487 = vld [vmem:[#allocation7 + $0x1e8] sm:$0xff]
        %v488 = vld [vmem:[#allocation7 + $0x1f0] sm:$0xff]
        %v489 = vld [vmem:[#allocation7 + $0x1f8] sm:$0xff]
        %v554 = vunpack.c.l.b16 %v426
        %v555 = vunpack.c.h.b16 %v426
        %v556 = vunpack.c.l.b16 %v427
        %v557 = vunpack.c.h.b16 %v427
        %v558 = vunpack.c.l.b16 %v428
        %v559 = vunpack.c.h.b16 %v428
        %v560 = vunpack.c.l.b16 %v429
        %v561 = vunpack.c.h.b16 %v429
        %v562 = vunpack.c.l.b16 %v430
        %v563 = vunpack.c.h.b16 %v430
        %v564 = vunpack.c.l.b16 %v431
        %v565 = vunpack.c.h.b16 %v431
        %v566 = vunpack.c.l.b16 %v432
        %v567 = vunpack.c.h.b16 %v432
        %v568 = vunpack.c.l.b16 %v433
        %v569 = vunpack.c.h.b16 %v433
        %v570 = vunpack.c.l.b16 %v434
        %v571 = vunpack.c.h.b16 %v434
        %v572 = vunpack.c.l.b16 %v435
        %v573 = vunpack.c.h.b16 %v435
        %v574 = vunpack.c.l.b16 %v436
        %v575 = vunpack.c.h.b16 %v436
        %v576 = vunpack.c.l.b16 %v437
        %v577 = vunpack.c.h.b16 %v437
        %v578 = vunpack.c.l.b16 %v438
        %v579 = vunpack.c.h.b16 %v438
        %v580 = vunpack.c.l.b16 %v439
        %v581 = vunpack.c.h.b16 %v439
        %v582 = vunpack.c.l.b16 %v440
        %v583 = vunpack.c.h.b16 %v440
        %v584 = vunpack.c.l.b16 %v441
        %v585 = vunpack.c.h.b16 %v441
        %v586 = vunpack.c.l.b16 %v442
        %v587 = vunpack.c.h.b16 %v442
        %v588 = vunpack.c.l.b16 %v443
        %v589 = vunpack.c.h.b16 %v443
        %v590 = vunpack.c.l.b16 %v444
        %v591 = vunpack.c.h.b16 %v444
        %v592 = vunpack.c.l.b16 %v445
        %v593 = vunpack.c.h.b16 %v445
        %v594 = vunpack.c.l.b16 %v446
        %v595 = vunpack.c.h.b16 %v446
        %v596 = vunpack.c.l.b16 %v447
        %v597 = vunpack.c.h.b16 %v447
        %v598 = vunpack.c.l.b16 %v448
        %v599 = vunpack.c.h.b16 %v448
        %v600 = vunpack.c.l.b16 %v449
        %v601 = vunpack.c.h.b16 %v449
        %v602 = vunpack.c.l.b16 %v450
        %v603 = vunpack.c.h.b16 %v450
        %v604 = vunpack.c.l.b16 %v451
        %v605 = vunpack.c.h.b16 %v451
        %v606 = vunpack.c.l.b16 %v452
        %v607 = vunpack.c.h.b16 %v452
        %v608 = vunpack.c.l.b16 %v453
        %v609 = vunpack.c.h.b16 %v453
        %v610 = vunpack.c.l.b16 %v454
        %v611 = vunpack.c.h.b16 %v454
        %v612 = vunpack.c.l.b16 %v455
        %v613 = vunpack.c.h.b16 %v455
        %v614 = vunpack.c.l.b16 %v456
        %v615 = vunpack.c.h.b16 %v456
        %v616 = vunpack.c.l.b16 %v457
        %v617 = vunpack.c.h.b16 %v457
        %v618 = vunpack.c.l.b16 %v458
        %v619 = vunpack.c.h.b16 %v458
        %v620 = vunpack.c.l.b16 %v459
        %v621 = vunpack.c.h.b16 %v459
        %v622 = vunpack.c.l.b16 %v460
        %v623 = vunpack.c.h.b16 %v460
        %v624 = vunpack.c.l.b16 %v461
        %v625 = vunpack.c.h.b16 %v461
        %v626 = vunpack.c.l.b16 %v462
        %v627 = vunpack.c.h.b16 %v462
        %v628 = vunpack.c.l.b16 %v463
        %v629 = vunpack.c.h.b16 %v463
        %v630 = vunpack.c.l.b16 %v464
        %v631 = vunpack.c.h.b16 %v464
        %v632 = vunpack.c.l.b16 %v465
        %v633 = vunpack.c.h.b16 %v465
        %v634 = vunpack.c.l.b16 %v466
        %v635 = vunpack.c.h.b16 %v466
        %v636 = vunpack.c.l.b16 %v467
        %v637 = vunpack.c.h.b16 %v467
        %v638 = vunpack.c.l.b16 %v468
        %v639 = vunpack.c.h.b16 %v468
        %v640 = vunpack.c.l.b16 %v469
        %v641 = vunpack.c.h.b16 %v469
        %v642 = vunpack.c.l.b16 %v470
        %v643 = vunpack.c.h.b16 %v470
        %v644 = vunpack.c.l.b16 %v471
        %v645 = vunpack.c.h.b16 %v471
        %v646 = vunpack.c.l.b16 %v472
        %v647 = vunpack.c.h.b16 %v472
        %v648 = vunpack.c.l.b16 %v473
        %v649 = vunpack.c.h.b16 %v473
        %v650 = vunpack.c.l.b16 %v474
        %v651 = vunpack.c.h.b16 %v474
        %v652 = vunpack.c.l.b16 %v475
        %v653 = vunpack.c.h.b16 %v475
        %v654 = vunpack.c.l.b16 %v476
        %v655 = vunpack.c.h.b16 %v476
        %v656 = vunpack.c.l.b16 %v477
        %v657 = vunpack.c.h.b16 %v477
        %v658 = vunpack.c.l.b16 %v478
        %v659 = vunpack.c.h.b16 %v478
        %v660 = vunpack.c.l.b16 %v479
        %v661 = vunpack.c.h.b16 %v479
        %v662 = vunpack.c.l.b16 %v480
        %v663 = vunpack.c.h.b16 %v480
        %v664 = vunpack.c.l.b16 %v481
        %v665 = vunpack.c.h.b16 %v481
        %v666 = vunpack.c.l.b16 %v482
        %v667 = vunpack.c.h.b16 %v482
        %v668 = vunpack.c.l.b16 %v483
        %v669 = vunpack.c.h.b16 %v483
        %v670 = vunpack.c.l.b16 %v484
        %v671 = vunpack.c.h.b16 %v484
        %v672 = vunpack.c.l.b16 %v485
        %v673 = vunpack.c.h.b16 %v485
        %v674 = vunpack.c.l.b16 %v486
        %v675 = vunpack.c.h.b16 %v486
        %v676 = vunpack.c.l.b16 %v487
        %v677 = vunpack.c.h.b16 %v487
        %v678 = vunpack.c.l.b16 %v488
        %v679 = vunpack.c.h.b16 %v488
        %v680 = vunpack.c.l.b16 %v489
        %v681 = vunpack.c.h.b16 %v489
        %v682 = vpack.c.b16 %v556, %v554
        %v683 = vpack.c.b16 %v557, %v555
        %v684 = vpack.c.b16 %v560, %v558
        %v685 = vpack.c.b16 %v561, %v559
        %v686 = vpack.c.b16 %v564, %v562
        %v687 = vpack.c.b16 %v565, %v563
        %v688 = vpack.c.b16 %v568, %v566
        %v689 = vpack.c.b16 %v569, %v567
        %v690 = vpack.c.b16 %v572, %v570
        %v691 = vpack.c.b16 %v573, %v571
        %v692 = vpack.c.b16 %v576, %v574
        %v693 = vpack.c.b16 %v577, %v575
        %v694 = vpack.c.b16 %v580, %v578
        %v695 = vpack.c.b16 %v581, %v579
        %v696 = vpack.c.b16 %v584, %v582
        %v697 = vpack.c.b16 %v585, %v583
        %v698 = vpack.c.b16 %v588, %v586
        %v699 = vpack.c.b16 %v589, %v587
        %v700 = vpack.c.b16 %v592, %v590
        %v701 = vpack.c.b16 %v593, %v591
        %v702 = vpack.c.b16 %v596, %v594
        %v703 = vpack.c.b16 %v597, %v595
        %v704 = vpack.c.b16 %v600, %v598
        %v705 = vpack.c.b16 %v601, %v599
        %v706 = vpack.c.b16 %v604, %v602
        %v707 = vpack.c.b16 %v605, %v603
        %v708 = vpack.c.b16 %v608, %v606
        %v709 = vpack.c.b16 %v609, %v607
        %v710 = vpack.c.b16 %v612, %v610
        %v711 = vpack.c.b16 %v613, %v611
        %v712 = vpack.c.b16 %v616, %v614
        %v713 = vpack.c.b16 %v617, %v615
        %v714 = vpack.c.b16 %v620, %v618
        %v715 = vpack.c.b16 %v621, %v619
        %v716 = vpack.c.b16 %v624, %v622
        %v717 = vpack.c.b16 %v625, %v623
        %v718 = vpack.c.b16 %v628, %v626
        %v719 = vpack.c.b16 %v629, %v627
        %v720 = vpack.c.b16 %v632, %v630
        %v721 = vpack.c.b16 %v633, %v631
        %v722 = vpack.c.b16 %v636, %v634
        %v723 = vpack.c.b16 %v637, %v635
        %v724 = vpack.c.b16 %v640, %v638
        %v725 = vpack.c.b16 %v641, %v639
        %v726 = vpack.c.b16 %v644, %v642
        %v727 = vpack.c.b16 %v645, %v643
        %v728 = vpack.c.b16 %v648, %v646
        %v729 = vpack.c.b16 %v649, %v647
        %v730 = vpack.c.b16 %v652, %v650
        %v731 = vpack.c.b16 %v653, %v651
        %v732 = vpack.c.b16 %v656, %v654
        %v733 = vpack.c.b16 %v657, %v655
        %v734 = vpack.c.b16 %v660, %v658
        %v735 = vpack.c.b16 %v661, %v659
        %v736 = vpack.c.b16 %v664, %v662
        %v737 = vpack.c.b16 %v665, %v663
        %v738 = vpack.c.b16 %v668, %v666
        %v739 = vpack.c.b16 %v669, %v667
        %v740 = vpack.c.b16 %v672, %v670
        %v741 = vpack.c.b16 %v673, %v671
        %v742 = vpack.c.b16 %v676, %v674
        %v743 = vpack.c.b16 %v677, %v675
        %v744 = vpack.c.b16 %v680, %v678
        %v745 = vpack.c.b16 %v681, %v679
        %810 = vmatpush.bf16.msra.mxu0 %v696
        %811 = vmatpush.bf16.msra.mxu0 %v694
        %812 = vmatpush.bf16.msra.mxu0 %v692
        %813 = vmatpush.bf16.msra.mxu0 %v690
        %814 = vmatpush.bf16.msra.mxu0 %v688
        %815 = vmatpush.bf16.msra.mxu0 %v686
        %816 = vmatpush.bf16.msra.mxu0 %v684
        %817 = vmatpush.bf16.msra.mxu0 %v682
        %818 = vmatmul.bf16.gmra.mxu0 %v422
        %v819 = vpop.f32.mrf.mxu0
        %v820 = vadd.f32 0.0, %v819
        %v821 = vpop.f32.mrf.mxu0
        %822 = vdwg.mxu0
        %823 = vmatpush.bf16.msra.mxu0 %v712
        %824 = vmatpush.bf16.msra.mxu0 %v710
        %825 = vmatpush.bf16.msra.mxu0 %v708
        %826 = vmatpush.bf16.msra.mxu0 %v706
        %827 = vmatpush.bf16.msra.mxu0 %v704
        %828 = vmatpush.bf16.msra.mxu0 %v702
        %829 = vmatpush.bf16.msra.mxu0 %v700
        %830 = vmatpush.bf16.msra.mxu0 %v698
        %831 = vmatmul.bf16.gmra.mxu0 %v423
        %v832 = vpop.f32.mrf.mxu0
        %v833 = vadd.f32 %v820, %v832
        %v834 = vpop.f32.mrf.mxu0
        %835 = vdwg.mxu0
        %836 = vmatpush.bf16.msra.mxu0 %v728
        %837 = vmatpush.bf16.msra.mxu0 %v726
        %838 = vmatpush.bf16.msra.mxu0 %v724
        %839 = vmatpush.bf16.msra.mxu0 %v722
        %840 = vmatpush.bf16.msra.mxu0 %v720
        %841 = vmatpush.bf16.msra.mxu0 %v718
        %842 = vmatpush.bf16.msra.mxu0 %v716
        %843 = vmatpush.bf16.msra.mxu0 %v714
        %844 = vmatmul.bf16.gmra.mxu0 %v424
        %v845 = vpop.f32.mrf.mxu0
        %v846 = vadd.f32 %v833, %v845
        %v847 = vpop.f32.mrf.mxu0
        %848 = vdwg.mxu0
        %849 = vmatpush.bf16.msra.mxu0 %v744
        %850 = vmatpush.bf16.msra.mxu0 %v742
        %851 = vmatpush.bf16.msra.mxu0 %v740
        %852 = vmatpush.bf16.msra.mxu0 %v738
        %853 = vmatpush.bf16.msra.mxu0 %v736
        %854 = vmatpush.bf16.msra.mxu0 %v734
        %855 = vmatpush.bf16.msra.mxu0 %v732
        %856 = vmatpush.bf16.msra.mxu0 %v730
        %857 = vmatmul.bf16.gmra.mxu0 %v425
        %v858 = vpop.f32.mrf.mxu0
        %v859 = vadd.f32 %v846, %v858
        %v860 = vpop.f32.mrf.mxu0
        %861 = vdwg.mxu0
        %862 = vmatpush.bf16.msra.mxu0 %v697
        %863 = vmatpush.bf16.msra.mxu0 %v695
        %864 = vmatpush.bf16.msra.mxu0 %v693
        %865 = vmatpush.bf16.msra.mxu0 %v691
        %866 = vmatpush.bf16.msra.mxu0 %v689
        %867 = vmatpush.bf16.msra.mxu0 %v687
        %868 = vmatpush.bf16.msra.mxu0 %v685
        %869 = vmatpush.bf16.msra.mxu0 %v683
        %870 = vmatmul.bf16.gmra.mxu0 %v422
        %v871 = vpop.f32.mrf.mxu0
        %v872 = vadd.f32 0.0, %v871
        %v873 = vpop.f32.mrf.mxu0
        %874 = vdwg.mxu0
        %875 = vmatpush.bf16.msra.mxu0 %v713
        %876 = vmatpush.bf16.msra.mxu0 %v711
        %877 = vmatpush.bf16.msra.mxu0 %v709
        %878 = vmatpush.bf16.msra.mxu0 %v707
        %879 = vmatpush.bf16.msra.mxu0 %v705
        %880 = vmatpush.bf16.msra.mxu0 %v703
        %881 = vmatpush.bf16.msra.mxu0 %v701
        %882 = vmatpush.bf16.msra.mxu0 %v699
        %883 = vmatmul.bf16.gmra.mxu0 %v423
        %v884 = vpop.f32.mrf.mxu0
        %v885 = vadd.f32 %v872, %v884
        %v886 = vpop.f32.mrf.mxu0
        %887 = vdwg.mxu0
        %888 = vmatpush.bf16.msra.mxu0 %v729
        %889 = vmatpush.bf16.msra.mxu0 %v727
        %890 = vmatpush.bf16.msra.mxu0 %v725
        %891 = vmatpush.bf16.msra.mxu0 %v723
        %892 = vmatpush.bf16.msra.mxu0 %v721
        %893 = vmatpush.bf16.msra.mxu0 %v719
        %894 = vmatpush.bf16.msra.mxu0 %v717
        %895 = vmatpush.bf16.msra.mxu0 %v715
        %896 = vmatmul.bf16.gmra.mxu0 %v424
        %v897 = vpop.f32.mrf.mxu0
        %v898 = vadd.f32 %v885, %v897
        %v899 = vpop.f32.mrf.mxu0
        %900 = vdwg.mxu0
        %901 = vmatpush.bf16.msra.mxu0 %v745
        %902 = vmatpush.bf16.msra.mxu0 %v743
        %903 = vmatpush.bf16.msra.mxu0 %v741
        %904 = vmatpush.bf16.msra.mxu0 %v739
        %905 = vmatpush.bf16.msra.mxu0 %v737
        %906 = vmatpush.bf16.msra.mxu0 %v735
        %907 = vmatpush.bf16.msra.mxu0 %v733
        %908 = vmatpush.bf16.msra.mxu0 %v731
        %909 = vmatmul.bf16.gmra.mxu0 %v425
        %v910 = vpop.f32.mrf.mxu0
        %v911 = vadd.f32 %v898, %v910
        %v912 = vpop.f32.mrf.mxu0
        %913 = vdwg.mxu0
        %v914 = vperm.slane %v421, 0
        %v915 = vadd.f32 %v859, %v914
        %v916 = vmax.f32 %v915, 0.0
        %v917 = vperm.slane %v421, 1
        %v918 = vadd.f32 %v911, %v917
        %v919 = vmax.f32 %v918, 0.0
        %v920 = vpack.c.bf16 %v916, %v916
        %v921 = vld [vmem:[#allocation8] sm:$0xf]
        %v922 = vld [vmem:[#allocation8 + $0x4] sm:$0xf]
        %v923 = vld [vmem:[#allocation8 + $0x8] sm:$0xf]
        %v924 = vld [vmem:[#allocation8 + $0xc] sm:$0xf]
        %v925 = vld [vmem:[#allocation8 + $0x10] sm:$0xf]
        %v926 = vld [vmem:[#allocation8 + $0x14] sm:$0xf]
        %v927 = vld [vmem:[#allocation8 + $0x18] sm:$0xf]
        %v928 = vld [vmem:[#allocation8 + $0x1c] sm:$0xf]
        %v929 = vld [vmem:[#allocation8 + $0x20] sm:$0xf]
        %v930 = vld [vmem:[#allocation8 + $0x24] sm:$0xf]
        %v931 = vld [vmem:[#allocation8 + $0x28] sm:$0xf]
        %v932 = vld [vmem:[#allocation8 + $0x2c] sm:$0xf]
        %v933 = vld [vmem:[#allocation8 + $0x30] sm:$0xf]
        %v934 = vld [vmem:[#allocation8 + $0x34] sm:$0xf]
        %v935 = vld [vmem:[#allocation8 + $0x38] sm:$0xf]
        %v936 = vld [vmem:[#allocation8 + $0x3c] sm:$0xf]
        %v937 = vperm.slane %v421, 2
        %v954 = vunpack.c.l.b16 %v921
        %v955 = vunpack.c.l.b16 %v922
        %v956 = vunpack.c.l.b16 %v923
        %v957 = vunpack.c.l.b16 %v924
        %v958 = vunpack.c.l.b16 %v925
        %v959 = vunpack.c.l.b16 %v926
        %v960 = vunpack.c.l.b16 %v927
        %v961 = vunpack.c.l.b16 %v928
        %v962 = vunpack.c.l.b16 %v929
        %v963 = vunpack.c.l.b16 %v930
        %v964 = vunpack.c.l.b16 %v931
        %v965 = vunpack.c.l.b16 %v932
        %v966 = vunpack.c.l.b16 %v933
        %v967 = vunpack.c.l.b16 %v934
        %v968 = vunpack.c.l.b16 %v935
        %v969 = vunpack.c.l.b16 %v936
        %v970 = vpack.c.b16 %v955, %v954
        %v971 = vpack.c.b16 %v957, %v956
        %v972 = vpack.c.b16 %v959, %v958
        %v973 = vpack.c.b16 %v961, %v960
        %v974 = vpack.c.b16 %v963, %v962
        %v975 = vpack.c.b16 %v965, %v964
        %v976 = vpack.c.b16 %v967, %v966
        %v977 = vpack.c.b16 %v969, %v968
        %986 = vmatpush.bf16.msra.mxu0 %v977
        %987 = vmatpush.bf16.msra.mxu0 %v976
        %988 = vmatpush.bf16.msra.mxu0 %v975
        %989 = vmatpush.bf16.msra.mxu0 %v974
        %990 = vmatpush.bf16.msra.mxu0 %v973
        %991 = vmatpush.bf16.msra.mxu0 %v972
        %992 = vmatpush.bf16.msra.mxu0 %v971
        %993 = vmatpush.bf16.msra.mxu0 %v970
        %994 = vmatmul.bf16.gmra.mxu0 %v920
        %v995 = vpop.f32.mrf.mxu0
        %v996 = vadd.f32 %v937, %v995
        %v997 = vpop.f32.mrf.mxu0
        %998 = vdwg.mxu0
        %v999 = vpack.c.bf16 %v919, %v919
        %v1000 = vld [vmem:[#allocation10] sm:$0xf]
        %v1001 = vld [vmem:[#allocation10 + $0x4] sm:$0xf]
        %v1002 = vld [vmem:[#allocation10 + $0x8] sm:$0xf]
        %v1003 = vld [vmem:[#allocation10 + $0xc] sm:$0xf]
        %v1004 = vld [vmem:[#allocation10 + $0x10] sm:$0xf]
        %v1005 = vld [vmem:[#allocation10 + $0x14] sm:$0xf]
        %v1006 = vld [vmem:[#allocation10 + $0x18] sm:$0xf]
        %v1007 = vld [vmem:[#allocation10 + $0x1c] sm:$0xf]
        %v1008 = vld [vmem:[#allocation10 + $0x20] sm:$0xf]
        %v1009 = vld [vmem:[#allocation10 + $0x24] sm:$0xf]
        %v1010 = vld [vmem:[#allocation10 + $0x28] sm:$0xf]
        %v1011 = vld [vmem:[#allocation10 + $0x2c] sm:$0xf]
        %v1012 = vld [vmem:[#allocation10 + $0x30] sm:$0xf]
        %v1013 = vld [vmem:[#allocation10 + $0x34] sm:$0xf]
        %v1014 = vld [vmem:[#allocation10 + $0x38] sm:$0xf]
        %v1015 = vld [vmem:[#allocation10 + $0x3c] sm:$0xf]
        %v1016 = vperm.slane %v421, 3
        %v1033 = vunpack.c.l.b16 %v1000
        %v1034 = vunpack.c.l.b16 %v1001
        %v1035 = vunpack.c.l.b16 %v1002
        %v1036 = vunpack.c.l.b16 %v1003
        %v1037 = vunpack.c.l.b16 %v1004
        %v1038 = vunpack.c.l.b16 %v1005
        %v1039 = vunpack.c.l.b16 %v1006
        %v1040 = vunpack.c.l.b16 %v1007
        %v1041 = vunpack.c.l.b16 %v1008
        %v1042 = vunpack.c.l.b16 %v1009
        %v1043 = vunpack.c.l.b16 %v1010
        %v1044 = vunpack.c.l.b16 %v1011
        %v1045 = vunpack.c.l.b16 %v1012
        %v1046 = vunpack.c.l.b16 %v1013
        %v1047 = vunpack.c.l.b16 %v1014
        %v1048 = vunpack.c.l.b16 %v1015
        %v1049 = vpack.c.b16 %v1034, %v1033
        %v1050 = vpack.c.b16 %v1036, %v1035
        %v1051 = vpack.c.b16 %v1038, %v1037
        %v1052 = vpack.c.b16 %v1040, %v1039
        %v1053 = vpack.c.b16 %v1042, %v1041
        %v1054 = vpack.c.b16 %v1044, %v1043
        %v1055 = vpack.c.b16 %v1046, %v1045
        %v1056 = vpack.c.b16 %v1048, %v1047
        %1065 = vmatpush.bf16.msra.mxu0 %v1056
        %1066 = vmatpush.bf16.msra.mxu0 %v1055
        %1067 = vmatpush.bf16.msra.mxu0 %v1054
        %1068 = vmatpush.bf16.msra.mxu0 %v1053
        %1069 = vmatpush.bf16.msra.mxu0 %v1052
        %1070 = vmatpush.bf16.msra.mxu0 %v1051
        %1071 = vmatpush.bf16.msra.mxu0 %v1050
        %1072 = vmatpush.bf16.msra.mxu0 %v1049
        %1073 = vmatmul.bf16.gmra.mxu0 %v999
        %v1074 = vpop.f32.mrf.mxu0
        %v1075 = vadd.f32 %v1016, %v1074
        %v1076 = vpop.f32.mrf.mxu0
        %1077 = vdwg.mxu0
        %1078 = vadd.xlane.f32.xlu0 %v416
        %v1079 = vpop.xlane.xlu0 %1078
        %v1080 = vrcp.pop 128.0
        %v1081 = vmul.f32 128.0, %v1080
        %v1082 = vsub.f32 1.0, %v1081
        %v1083 = vmul.f32 %v1080, %v1082
        %v1084 = vadd.f32 %v1080, %v1083
        %vm1085 = vweird.f32 %v1080
        %v1086 = vsel %vm1085, %v1080, %v1084
        %v1087 = vmul.f32 %v1079, %v1086
        %v1088 = vsub.f32 %v416, %v1087
        %v1089 = vmul.f32 %v1088, %v1088
        %1090 = vadd.xlane.f32.xlu0 %v1089
        %v1091 = vpop.xlane.xlu0 %1090
        %v1092 = vmul.f32 %v1091, 0.007874016
        %v1093 = vrsqrt.pop %v1092
        %v1094 = vmul.f32 %v1093, %v1092
        %v1095 = vmul.f32 %v1094, %v1093
        %v1096 = vmul.f32 0.5, %v1095
        %v1097 = vsub.f32 1.5, %v1096
        %v1098 = vmul.f32 %v1093, %v1097
        %v1099 = vmul.f32 %v1092, %v1098
        %vm1100 = vcmp.eq.f32.partialorder %v1092, inf
        %v1101 = vsel %vm1100, %v1092, %v1099
        %vm1102 = vcmp.eq.f32.partialorder %v1092, 0.0
        %v1103 = vand.u32 %v1092, 2147483648
        %v1104 = vsel %vm1102, %v1103, %v1101
        %v1105 = vadd.f32 %v1104, 1e-06
        %v1106 = vrcp.pop %v1105
        %v1107 = vmul.f32 %v1105, %v1106
        %v1108 = vsub.f32 1.0, %v1107
        %v1109 = vmul.f32 %v1106, %v1108
        %v1110 = vadd.f32 %v1106, %v1109
        %vm1111 = vweird.f32 %v1105
        %vm1112 = vweird.f32 %v1106
        %vm1113 = vmor %vm1111, %vm1112
        %v1114 = vsel %vm1113, %v1106, %v1110
        %v1115 = vand.u32 2147483647, %v1105
        %vm1116 = vcmp.eq.f32.partialorder %v1115, 8.507059e+37
        %v1117 = vand.u32 %v1105, 2147483648
        %v1118 = vor.u32 1.1754944e-38, %v1117
        %v1119 = vsel %vm1116, %v1118, %v1114
        %v1120 = vmul.f32 1.0, %v1119
        %v1121 = vmul.f32 %v1088, %v1120
        %v1122 = vmul.f32 %v996, %v1121
        %v1123 = vadd.f32 %v1122, %v1075
        %v1124 = vpack.c.bf16 %v1123, %v1123
        %v1125 = vld [vmem:[#allocation11] sm:$0xf]
        %v1126 = vld [vmem:[#allocation11 + $0x4] sm:$0xf]
        %v1127 = vld [vmem:[#allocation11 + $0x8] sm:$0xf]
        %v1128 = vld [vmem:[#allocation11 + $0xc] sm:$0xf]
        %v1129 = vld [vmem:[#allocation11 + $0x10] sm:$0xf]
        %v1130 = vld [vmem:[#allocation11 + $0x14] sm:$0xf]
        %v1131 = vld [vmem:[#allocation11 + $0x18] sm:$0xf]
        %v1132 = vld [vmem:[#allocation11 + $0x1c] sm:$0xf]
        %v1133 = vld [vmem:[#allocation11 + $0x20] sm:$0xf]
        %v1134 = vld [vmem:[#allocation11 + $0x24] sm:$0xf]
        %v1135 = vld [vmem:[#allocation11 + $0x28] sm:$0xf]
        %v1136 = vld [vmem:[#allocation11 + $0x2c] sm:$0xf]
        %v1137 = vld [vmem:[#allocation11 + $0x30] sm:$0xf]
        %v1138 = vld [vmem:[#allocation11 + $0x34] sm:$0xf]
        %v1139 = vld [vmem:[#allocation11 + $0x38] sm:$0xf]
        %v1140 = vld [vmem:[#allocation11 + $0x3c] sm:$0xf]
        %v1141 = vperm.slane %v421, 4
        %v1158 = vunpack.c.l.b16 %v1125
        %v1159 = vunpack.c.l.b16 %v1126
        %v1160 = vunpack.c.l.b16 %v1127
        %v1161 = vunpack.c.l.b16 %v1128
        %v1162 = vunpack.c.l.b16 %v1129
        %v1163 = vunpack.c.l.b16 %v1130
        %v1164 = vunpack.c.l.b16 %v1131
        %v1165 = vunpack.c.l.b16 %v1132
        %v1166 = vunpack.c.l.b16 %v1133
        %v1167 = vunpack.c.l.b16 %v1134
        %v1168 = vunpack.c.l.b16 %v1135
        %v1169 = vunpack.c.l.b16 %v1136
        %v1170 = vunpack.c.l.b16 %v1137
        %v1171 = vunpack.c.l.b16 %v1138
        %v1172 = vunpack.c.l.b16 %v1139
        %v1173 = vunpack.c.l.b16 %v1140
        %v1174 = vpack.c.b16 %v1159, %v1158
        %v1175 = vpack.c.b16 %v1161, %v1160
        %v1176 = vpack.c.b16 %v1163, %v1162
        %v1177 = vpack.c.b16 %v1165, %v1164
        %v1178 = vpack.c.b16 %v1167, %v1166
        %v1179 = vpack.c.b16 %v1169, %v1168
        %v1180 = vpack.c.b16 %v1171, %v1170
        %v1181 = vpack.c.b16 %v1173, %v1172
        %1190 = vmatpush.bf16.msra.mxu0 %v1181
        %1191 = vmatpush.bf16.msra.mxu0 %v1180
        %1192 = vmatpush.bf16.msra.mxu0 %v1179
        %1193 = vmatpush.bf16.msra.mxu0 %v1178
        %1194 = vmatpush.bf16.msra.mxu0 %v1177
        %1195 = vmatpush.bf16.msra.mxu0 %v1176
        %1196 = vmatpush.bf16.msra.mxu0 %v1175
        %1197 = vmatpush.bf16.msra.mxu0 %v1174
        %1198 = vmatmul.bf16.gmra.mxu0 %v1124
        %v1199 = vpop.f32.mrf.mxu0
        %v1200 = vadd.f32 %v1141, %v1199
        %v1201 = vpop.f32.mrf.mxu0
        %1202 = vdwg.mxu0
        %v1203 = vadd.f32 %v416, %v1200
        %1204 = vst [vmem:[%s415] sm:$0xff] %v1203
        %s1205 = sand.u32 %s194, 1
        %s1206 = scalar_lea.sflag [#allocation4], %s1205
        %s1207 = sand.u32 %s194, 1
        %s1208 = smul.addr %s1207, 8
        %s1209 = scalar_lea.vmem [#allocation14], %s1208
        // Predicated region
        $region77: #{tpu_custom_call.1} parent=47 // pred_check
          %p1210 = pneg %p204
        $region78: #{tpu_custom_call.1} parent=47 // pred_check_branch
          %1212 = sbr.rel (%p1210) target = $region80
        $region79: #{tpu_custom_call.1} parent=47 // pred_region
          %1214 = vsyncadd %s1206, 0
          %s1215 = smul.addr %s29, 8
          %s1216 = scalar_lea.hbm %s7, %s1215
          %s1218 = sshll.u32 %s1209, 4
          %s1219 = int_to_ptr.vmem [resolvable:$true] %s1218
          %s1220 = sshll.u32 %s1216, 4
          %s1221 = int_to_ptr.hbm [resolvable:$true] %s1220
          %1223 = dma.vmem_to_hbm [thread:$0]  %s1219, 128, %s1221, %s1206
        $region80: #{tpu_custom_call.1} parent=47 // pred_fallthru
          _
      $region48: #{tpu_custom_call.1} parent=5 // pred_fallthru
        _
      %p1224 = scmp.le.s32.totalorder 2, %s24
      // Predicated region
      $region81: #{tpu_custom_call.1} parent=5 // pred_check
        %p1225 = pneg %p1224
      $region82: #{tpu_custom_call.1} parent=5 // pred_check_branch
        %1227 = sbr.rel (%p1225) target = $region84
      $region83: #{tpu_custom_call.1} parent=5 // pred_region
        %s1228 = ssub.s32 %s24, 2
        // Predicated region
        $region85: #{tpu_custom_call.1} parent=83 // pred_check
          %p1229 = pneg %p210
        $region86: #{tpu_custom_call.1} parent=83 // pred_check_branch
          %1231 = sbr.rel (%p1229) target = $region88
        $region87: #{tpu_custom_call.1} parent=83 // pred_region
          %s1232 = sand.u32 %s195, 1
          %s1233 = scalar_lea.sflag [#allocation4], %s1232
          %s1234 = sand.u32 %s195, 1
          %s1235 = smul.addr %s1234, 8
          %s1236 = scalar_lea.vmem [#allocation14], %s1235
          %1238 = dma.done %s1233, 128
        $region88: #{tpu_custom_call.1} parent=83 // pred_fallthru
          _
      $region84: #{tpu_custom_call.1} parent=5 // pred_fallthru
        _
    $region6: #{tpu_custom_call.1} parent=1 // loop_footer
      %s28 = sadd.s32 1, %s24
    $region7: #{tpu_custom_call.1} parent=1 // loop_footer_branch
      %23 = sbr.rel target = $region3
    $region8: #{tpu_custom_call.1} parent=1 // loop_exit
      _
    %1239 = vsyncpa [#allocation3], 1
    %s1240 = scalar_lea.sflag [#allocation3], 1
    %1241 = vsyncpa %s1240, 1
    %1242 = vsyncpa [#allocation6], 1
    %s1243 = scalar_lea.sflag [#allocation6], 1
    %1244 = vsyncpa %s1243, 1
    %1245 = vsyncpa [#allocation9], 1
    %1246 = vsyncpa [#allocation12], 1
    %1247 = vsyncpa [#allocation4], 1
    %s1248 = scalar_lea.sflag [#allocation4], 1
    %1249 = vsyncpa %s1248, 1

</llo_original>
